<compile_context>
chip_gen: v5e
topology: v5e:2x2
jax: 0.10.0
libtpu: 0.0.40
codegen_flags: <defaults>
</compile_context>

<pallas_src>
import math

import jax
import jax.numpy as jnp
from jax import lax
from jax.experimental import pallas as pl
from jax.experimental.pallas import tpu as pltpu


def _silu(x):
    return x * (1.0 / (1.0 + jnp.exp(-x)))


def _softplus(x):
    # numerically-safe softplus that lowers cleanly in Mosaic
    return jnp.where(x > 30.0, x, jnp.log(1.0 + jnp.exp(jnp.minimum(x, 30.0))))


# --------------------------- Pallas kernels ---------------------------------

def _in_proj_kernel(x_ref, w_ref, xo_ref, zo_ref):
    # one row-tile of in_proj; split the 2*d_inner output into x / z halves
    dc = xo_ref.shape[-1]
    xz = jnp.dot(x_ref[...], w_ref[...], preferred_element_type=jnp.float32)
    xo_ref[...] = xz[:, :dc]
    zo_ref[...] = xz[:, dc:]


def _scan_core_kernel(x_ref, convw_ref, convb_ref, wdelta_ref, wB_ref, wC_ref,
                      dtb_ref, A_ref, Ds_ref, E_ref,
                      y_ref,
                      u_s, delta_s, B_s, C_s):
    """Depthwise conv1d + projections + selective scan for one batch element.

    All [*, D] tensors (D = n_views * d_inner) are lane-dense.
    """
    L, D = x_ref.shape
    N = A_ref.shape[0]                      # d_state
    V = E_ref.shape[0]                      # n_views
    f32 = jnp.float32

    # ---- depthwise conv1d (kernel 3, pad 1) along L + SiLU ------------------
    xv = x_ref[...]                         # [L, D]
    w = convw_ref[...]                      # [3, D]
    zrow = jnp.zeros((1, D), f32)
    x_prev = jnp.concatenate([zrow, xv[:L - 1]], axis=0)
    x_next = jnp.concatenate([xv[1:], zrow], axis=0)
    conv = w[0:1] * x_prev + w[1:2] * xv + w[2:3] * x_next + convb_ref[...]
    u = _silu(conv)                         # [L, D]
    u_s[...] = u

    # ---- fused dt projection (x_proj dt-rows ∘ dt_proj), one MXU matmul -----
    delta_s[...] = _softplus(
        jnp.dot(u, wdelta_ref[...], preferred_element_type=f32) + dtb_ref[...])

    # ---- B / C projections: block-diag over views, n-major columns ----------
    Bmat = jnp.dot(u, wB_ref[...], preferred_element_type=f32)   # [L, N*V]
    Cmat = jnp.dot(u, wC_ref[...], preferred_element_type=f32)   # [L, N*V]
    for n in range(N):                       # static, once per grid step
        B_s[:, n, :] = Bmat[:, n * V:(n + 1) * V]
        C_s[:, n, :] = Cmat[:, n * V:(n + 1) * V]

    A = A_ref[...]                           # [N, D]  (= -exp(A_log), transposed)
    E = E_ref[...]                           # [V, D]  0/1 expansion matrix
    Dsv = Ds_ref[...]                        # [1, D]

    # ---- selective scan over L; state h is [N, D] (full 128-lane vregs) -----
    def step(l, h):
        dl = delta_s[pl.ds(l, 1), :]         # [1, D]
        ul = u_s[pl.ds(l, 1), :]             # [1, D]
        Blb = jnp.dot(B_s[l], E, preferred_element_type=f32)   # [N, D]
        Clb = jnp.dot(C_s[l], E, preferred_element_type=f32)   # [N, D]
        dA = jnp.exp(dl * A)                                   # [N, D]
        h = dA * h + (dl * ul) * Blb
        yl = jnp.sum(Clb * h, axis=0, keepdims=True) + Dsv * ul  # [1, D]
        y_ref[pl.ds(l, 1), :] = yl           # lane-dense store, no y scratch
        return h

    lax.fori_loop(0, L, step, jnp.zeros((N, D), f32), unroll=min(4, L))


def _gate_out_kernel(y_ref, z_ref, lnw_ref, lnb_ref, w_ref, o_ref):
    # LayerNorm(d_inner) -> * SiLU(z) -> out_proj matmul, one row-tile
    y = y_ref[...]
    mu = jnp.mean(y, axis=-1, keepdims=True)
    d = y - mu
    var = jnp.mean(d * d, axis=-1, keepdims=True)
    yn = d * lax.rsqrt(var + 1e-5) * lnw_ref[...] + lnb_ref[...]
    o_ref[...] = jnp.dot(yn * _silu(z_ref[...]), w_ref[...],
                         preferred_element_type=jnp.float32)


# --------------------------- wrapper -----------------------------------------

def _row_tile(m, cap=256):
    # largest divisor of m that is <= cap and a multiple of 8 (keeps VMEM
    # bounded + pipelined at production sizes; raise cap for bigger machines)
    for t in range(min(cap, m), 7, -1):
        if m % t == 0 and t % 8 == 0:
            return t
    return m


def _const_spec(shape):
    nd = len(shape)
    return pl.BlockSpec(shape, lambda *_, _nd=nd: (0,) * _nd)


def ss2d_forward(x, params):
    B, L, V, C = x.shape                     # C == d_model
    dc = params['W_in'].shape[0] // 2        # d_inner
    N = params['A_logs'].shape[1]            # d_state
    R = params['dt_w'].shape[2]              # dt_rank
    D = V * dc                               # lane-dense channel axis
    M = B * L * V
    f32 = jnp.float32

    # ---- in_proj: row-tiled MXU matmul, two outputs (no XLA slice copy) -----
    TM = _row_tile(M)
    x2d = x.reshape(M, C).astype(f32)
    w_in_t = params['W_in'].T.astype(f32)                        # [C, 2*dc]
    x_part, z_part = pl.pallas_call(
        _in_proj_kernel,
        out_shape=(jax.ShapeDtypeStruct((M, dc), f32),
                   jax.ShapeDtypeStruct((M, dc), f32)),
        grid=(M // TM,),
        in_specs=[pl.BlockSpec((TM, C), lambda i: (i, 0)),
                  _const_spec((C, 2 * dc))],
        out_specs=(pl.BlockSpec((TM, dc), lambda i: (i, 0)),
                   pl.BlockSpec((TM, dc), lambda i: (i, 0))),
        compiler_params=pltpu.CompilerParams(dimension_semantics=("parallel",)),
    )(x2d, w_in_t)

    # ---- constant weights, re-laid-out for the lane-dense (v, c) channel ----
    xpw = params['x_proj_w'].astype(f32)                         # [V, R+2N, dc]
    dtw = params['dt_w'].astype(f32)                             # [V, dc, R]
    eyeV = jnp.eye(V, dtype=f32)

    convw = jnp.tile(params['conv_w'][:, 0, :].astype(f32).T, (1, V))   # [3, D]
    convb = jnp.tile(params['conv_b'].astype(f32), V).reshape(1, D)

    # fused dt projection (x_proj dt-rows composed with dt_proj), block-diag
    m_dt = jnp.einsum('vrc,vdr->vcd', xpw[:, :R, :], dtw)        # [V, dc, dc]
    w_delta = jnp.einsum('vcd,vw->vcwd', m_dt, eyeV).reshape(D, D)
    # B / C projections, block-diag over views, n-major output columns
    w_B = jnp.einsum('vnc,vw->vcnw', xpw[:, R:R + N, :], eyeV).reshape(D, N * V)
    w_C = jnp.einsum('vnc,vw->vcnw', xpw[:, R + N:, :], eyeV).reshape(D, N * V)

    dtb = params['dt_b'].astype(f32).reshape(1, D)
    A_t = (-jnp.exp(params['A_logs'].astype(f32))).T             # [N, D]
    Ds_flat = params['Ds'].astype(f32).reshape(1, D)
    E = jnp.repeat(eyeV, dc, axis=1)                             # [V, D], 0/1

    # ---- fused conv + projections + selective scan (grid over B, parallel) --
    # TODO(synk): tile L (and stream the B/C blocks) inside this kernel for
    # long sequences so the per-step VMEM stays within v7x's 64 MiB budget.
    x_core = x_part.reshape(B, L, D)                             # free reshape
    y_scan = pl.pallas_call(
        _scan_core_kernel,
        out_shape=jax.ShapeDtypeStruct((B, L, D), f32),
        grid=(B,),
        in_specs=[
            pl.BlockSpec((None, L, D), lambda b: (b, 0, 0)),
            _const_spec((3, D)),
            _const_spec((1, D)),
            _const_spec((D, D)),
            _const_spec((D, N * V)),
            _const_spec((D, N * V)),
            _const_spec((1, D)),
            _const_spec((N, D)),
            _const_spec((1, D)),
            _const_spec((V, D)),
        ],
        out_specs=pl.BlockSpec((None, L, D), lambda b: (b, 0, 0)),
        scratch_shapes=[
            pltpu.VMEM((L, D), f32),      # u
            pltpu.VMEM((L, D), f32),      # delta
            pltpu.VMEM((L, N, V), f32),   # B  (per-step [N, V])
            pltpu.VMEM((L, N, V), f32),   # C
        ],
        compiler_params=pltpu.CompilerParams(dimension_semantics=("parallel",)),
    )(x_core, convw, convb, w_delta, w_B, w_C, dtb, A_t, Ds_flat, E)

    # torch: selective_scan output memory is [B, D, L]; `.view(B, L, V, dc)` is
    # a raw row-major reinterpretation of that memory — replicated exactly.
    y2d = jnp.transpose(y_scan, (0, 2, 1)).reshape(M, dc)

    # ---- out_norm + SiLU(z) gate + out_proj: row-tiled MXU matmul -----------
    lnw = params['ln_w'].astype(f32).reshape(1, dc)
    lnb = params['ln_b'].astype(f32).reshape(1, dc)
    w_out_t = params['W_out'].T.astype(f32)                      # [dc, d_model]
    out2d = pl.pallas_call(
        _gate_out_kernel,
        out_shape=jax.ShapeDtypeStruct((M, C), f32),
        grid=(M // TM,),
        in_specs=[pl.BlockSpec((TM, dc), lambda i: (i, 0)),
                  pl.BlockSpec((TM, dc), lambda i: (i, 0)),
                  _const_spec((1, dc)),
                  _const_spec((1, dc)),
                  _const_spec((dc, C))],
        out_specs=pl.BlockSpec((TM, C), lambda i: (i, 0)),
        compiler_params=pltpu.CompilerParams(dimension_semantics=("parallel",)),
    )(y2d, z_part, lnw, lnb, w_out_t)
    # dropout p=0.0 in the reference module -> identity
    return out2d.reshape(B, L, V, C)


# --------------------------- pure-JAX reference -------------------------------

def reference_forward(x, params):
    B, L, V, _ = x.shape
    d_inner = params['W_in'].shape[0] // 2
    N = params['A_logs'].shape[1]
    R = params['dt_w'].shape[2]

    xz = x @ params['W_in'].T
    xp_, z = xz[..., :d_inner], xz[..., d_inner:]
    xc = jnp.transpose(xp_, (0, 2, 3, 1)).reshape(B * V, d_inner, L)   # (b v) c l
    xpad = jnp.pad(xc, ((0, 0), (0, 0), (1, 1)))
    w = params['conv_w'][:, 0, :]                                      # [d_inner, 3]
    conv = (w[None, :, 0:1] * xpad[:, :, 0:L] + w[None, :, 1:2] * xpad[:, :, 1:L + 1]
            + w[None, :, 2:3] * xpad[:, :, 2:L + 2]) + params['conv_b'][None, :, None]
    u = _silu(conv)

    xv = u.reshape(B, V, d_inner, L)
    x_dbl = jnp.einsum('bvdl,vcd->bvcl', xv, params['x_proj_w'])
    dts = x_dbl[:, :, :R]
    Bs = x_dbl[:, :, R:R + N]
    Cs = x_dbl[:, :, R + N:]
    dts = jnp.einsum('bvrl,vdr->bvdl', dts, params['dt_w'])

    u_flat = xv.reshape(B, V * d_inner, L)
    delta = _softplus(dts.reshape(B, V * d_inner, L)
                      + params['dt_b'].reshape(-1)[None, :, None])
    A = -jnp.exp(params['A_logs'])
    D = params['Ds']

    h = jnp.zeros((B, V * d_inner, N), jnp.float32)
    ys = []
    for l in range(L):
        dl = delta[:, :, l]
        dA = jnp.exp(dl[:, :, None] * A[None])
        Bl = jnp.repeat(Bs[:, :, :, l], d_inner, axis=1)
        Cl = jnp.repeat(Cs[:, :, :, l], d_inner, axis=1)
        h = dA * h + dl[:, :, None] * Bl * u_flat[:, :, l][:, :, None]
        ys.append(jnp.sum(Cl * h, axis=-1) + D[None] * u_flat[:, :, l])
    out_scan = jnp.stack(ys, axis=-1)                       # [B, V*d_inner, L]
    out_y = out_scan.reshape(B, L, V, d_inner)              # torch .view reinterpretation

    mu = out_y.mean(-1, keepdims=True)
    d = out_y - mu
    var = (d * d).mean(-1, keepdims=True)
    yn = d * lax.rsqrt(var + 1e-5) * params['ln_w'] + params['ln_b']
    return (yn * _silu(z)) @ params['W_out'].T


# --------------------------- main ---------------------------------------------

if __name__ == "__main__":
    d_model, d_state, d_conv, expand, n_views = 16, 16, 3, 2, 8
    d_inner = expand * d_model                 # 32
    dt_rank = math.ceil(d_model / 16)          # 1
    B, L, V = 2, 32, n_views                   # M = B*L*V = 512 -> 2 row-tiles

    key = jax.random.PRNGKey(0)
    ks = jax.random.split(key, 10)

    dt = jnp.exp(jax.random.uniform(ks[5], (n_views, d_inner))
                 * (math.log(0.1) - math.log(0.001)) + math.log(0.001))
    dt = jnp.clip(dt, 1e-4, None)
    params = {
        'W_in': (jax.random.normal(ks[0], (2 * d_inner, d_model)) * 0.1).astype(jnp.float32),
        'conv_w': (jax.random.normal(ks[1], (d_inner, 1, d_conv)) * 0.2).astype(jnp.float32),
        'conv_b': (jax.random.normal(ks[2], (d_inner,)) * 0.05).astype(jnp.float32),
        'x_proj_w': (jax.random.normal(ks[3], (n_views, dt_rank + 2 * d_state, d_inner))
                     * 0.1).astype(jnp.float32),
        'dt_w': jax.random.uniform(ks[4], (n_views, d_inner, dt_rank),
                                   minval=-dt_rank ** -0.5,
                                   maxval=dt_rank ** -0.5).astype(jnp.float32),
        'dt_b': (dt + jnp.log(-jnp.expm1(-dt))).astype(jnp.float32),
        'A_logs': jnp.log(jnp.tile(jnp.arange(1, d_state + 1, dtype=jnp.float32)[None, :],
                                   (n_views * d_inner, 1))),
        'Ds': jnp.ones((n_views * d_inner,), jnp.float32),
        'ln_w': jnp.ones((d_inner,), jnp.float32),
        'ln_b': jnp.zeros((d_inner,), jnp.float32),
        'W_out': (jax.random.normal(ks[6], (d_model, d_inner)) * 0.1).astype(jnp.float32),
    }

    x = jax.random.normal(ks[7], (B, L, V, d_model), dtype=jnp.float32)

    out = jax.block_until_ready(ss2d_forward(x, params))

    ref = reference_forward(x, params)
    max_diff = float(jnp.max(jnp.abs(out - ref)))
    assert bool(jnp.allclose(out, ref, atol=2e-3, rtol=2e-3)), f"max abs diff {max_diff}"

    print("KERNEL_OK")
</pallas_src>

<mosaic_0001>
module attributes {stable_mosaic.version = 11 : i64} {
  func.func @_in_proj_kernel(%arg0: i32, %arg1: memref<256x16xf32, #tpu.memory_space<vmem>>, %arg2: memref<16x64xf32, #tpu.memory_space<vmem>>, %arg3: memref<256x32xf32, #tpu.memory_space<vmem>>, %arg4: memref<256x32xf32, #tpu.memory_space<vmem>>) attributes {dimension_semantics = [#tpu.dimension_semantics<parallel>], iteration_bounds = array<i64: 2>, scalar_prefetch = 0 : i64, scratch_operands = 0 : i64, tpu.core_type = #tpu.core_type<tc>, window_params = [{transform_indices = @transform_0, window_bounds = array<i64: 256, 16>}, {pipeline_mode = #tpu.pipeline_mode<synchronous>, transform_indices = @transform_1, window_bounds = array<i64: 16, 64>}, {transform_indices = @transform_2, window_bounds = array<i64: 256, 32>}, {transform_indices = @transform_3, window_bounds = array<i64: 256, 32>}]} {
    %c0 = arith.constant 0 : index
    %c0_0 = arith.constant 0 : index
    %0 = vector.load %arg1[%c0, %c0_0] : memref<256x16xf32, #tpu.memory_space<vmem>>, vector<256x16xf32>
    %c0_1 = arith.constant 0 : index
    %c0_2 = arith.constant 0 : index
    %1 = vector.load %arg2[%c0_1, %c0_2] : memref<16x64xf32, #tpu.memory_space<vmem>>, vector<16x64xf32>
    %cst = arith.constant dense<0.000000e+00> : vector<256x64xf32>
    %2 = tpu.matmul %0, %1, %cst {dimension_numbers = #tpu.dot_dimension_numbers<[1], [0], [0], [1], [0, 0, 1, 1], [], []>} : vector<256x16xf32>, vector<16x64xf32>, vector<256x64xf32> -> vector<256x64xf32>
    %3 = vector.extract_strided_slice %2 {offsets = [0, 0], sizes = [256, 32], strides = [1, 1]} : vector<256x64xf32> to vector<256x32xf32>
    %c0_3 = arith.constant 0 : index
    %c0_4 = arith.constant 0 : index
    %4 = vector.load %arg3[%c0_3, %c0_4] : memref<256x32xf32, #tpu.memory_space<vmem>>, vector<256x32xf32>
    tpu.vector_store %arg3[%c0_3, %c0_4], %3 {strides = array<i32>} : memref<256x32xf32, #tpu.memory_space<vmem>>, vector<256x32xf32>,
    %5 = vector.extract_strided_slice %2 {offsets = [0, 32], sizes = [256, 32], strides = [1, 1]} : vector<256x64xf32> to vector<256x32xf32>
    %c0_5 = arith.constant 0 : index
    %c0_6 = arith.constant 0 : index
    %6 = vector.load %arg4[%c0_5, %c0_6] : memref<256x32xf32, #tpu.memory_space<vmem>>, vector<256x32xf32>
    tpu.vector_store %arg4[%c0_5, %c0_6], %5 {strides = array<i32>} : memref<256x32xf32, #tpu.memory_space<vmem>>, vector<256x32xf32>,
    return
  }
  func.func @transform_0(%arg0: i32) -> (i32, i32) {
    %c0_i32 = arith.constant 0 : i32
    %c0_i32_0 = arith.constant 0 : i32
    return %arg0, %c0_i32 : i32, i32
  }
  func.func @transform_1(%arg0: i32) -> (i32, i32) {
    %c0_i32 = arith.constant 0 : i32
    %c0_i32_0 = arith.constant 0 : i32
    %c0_i32_1 = arith.constant 0 : i32
    return %c0_i32, %c0_i32_0 : i32, i32
  }
  func.func @transform_2(%arg0: i32) -> (i32, i32) {
    %c0_i32 = arith.constant 0 : i32
    %c0_i32_0 = arith.constant 0 : i32
    return %arg0, %c0_i32 : i32, i32
  }
  func.func @transform_3(%arg0: i32) -> (i32, i32) {
    %c0_i32 = arith.constant 0 : i32
    %c0_i32_0 = arith.constant 0 : i32
    return %arg0, %c0_i32 : i32, i32
  }
}

</mosaic_0001>

<llo_original>
// kernel: tpu_custom_call.1
$region0: #{tpu_custom_call.1}
  #allocation0 [shape = 'u32[]', space=smem, size = 0x4, offset = 0x4, fixed_abs, tag = 'smem constant byte address 0x4 - core index']
  #allocation1 [shape = 'u32[72,128]{1,0:T(1,128)}', space=vmem, size = 0x9000, scoped, tag = 'internal scratch']
  %s0 = inlined_call_operand.vmem [shape: f32[512,16], index: 0, kind: input, shape index: {}]
  %s1 = inlined_call_operand.vmem [shape: f32[16,64], index: 1, kind: input, shape index: {}]
  %s2 = inlined_call_operand.vmem [shape: f32[512,32], index: 2, kind: output, shape index: {0}]
  %s3 = inlined_call_operand.vmem [shape: f32[512,32], index: 3, kind: output, shape index: {1}]
  %4 = xla_tuple %s2, %s3
  %s5 = sld [smem:[#allocation0]]
  $region49: #{tpu_custom_call.1} parent=0
    _
  %s7 = ssub.s32 1, %s5
  %s8 = scalar_select 0, %s7, %s5
  loop: start=0, step=1, limit=4
  $region2: #{tpu_custom_call.1} parent=0 // loop_pre_header
    _
  $region3: #{tpu_custom_call.1} parent=0 // loop_header
    %s10 = sphi 0, %s14
    %p11 = scmp.ge.s32.totalorder %s10, 4
    %s20 = sphi 0, %s22
    %s23 = sphi 0, %s20
    %s24 = sphi 0, %s23
    %s40 = sphi 0, %s24
    %s44 = sphi 0, %s44
    %s46 = sphi 0, %s44
    %s47 = sphi 0, %s46
    %s61 = sphi 0, %s47
    %s67 = sphi 0, %s69
    %s70 = sphi 0, %s67
    %s71 = sphi 0, %s70
    %s87 = sphi 0, %s71
    %s93 = sphi 0, %s95
    %s96 = sphi 0, %s93
    %s97 = sphi 0, %s96
    %s113 = sphi 0, %s97
  $region4: #{tpu_custom_call.1} parent=0 // loop_header_branch
    %13 = sbr.rel (%p11) target = $region8
  $region5: #{tpu_custom_call.1} parent=0 // loop_body
    %s15 = ssub.s32 %s10, 1
    %s16 = ssub.s32 %s10, 2
    %s17 = sadd.s32 %s10, 1
    %s18 = ssub.s32 %s10, %s17
    %p19 = scmp.eq.s32.totalorder %s18, 0
    %s21 = sadd.s32 %s20, 1
    %s22 = scalar_select %p19, %s20, %s21
    %p25 = pneg %p19
    %p26 = scmp.eq.s32.totalorder %s10, 1
    %p27 = por %p25, %p26
    %p28 = scmp.ne.s32.totalorder %s20, %s23
    %p29 = scmp.eq.s32.totalorder %s10, 0
    %p30 = por %p28, %p29
    %p31 = scmp.ne.s32.totalorder %s20, %s23
    %p32 = scmp.eq.s32.totalorder %s15, 1
    %p33 = por %p31, %p32
    %p34 = scmp.ne.s32.totalorder %s23, %s24
    %p35 = scmp.eq.s32.totalorder %s15, 0
    %p36 = por %p34, %p35
    %p37 = scmp.ne.s32.totalorder %s23, %s24
    %p38 = scmp.eq.s32.totalorder %s16, 1
    %p39 = por %p37, %p38
    %p41 = scmp.ne.s32.totalorder %s24, %s40
    %p42 = scmp.eq.s32.totalorder %s16, 0
    %p43 = por %p41, %p42
    %s45 = sadd.s32 %s44, 1
    %p48 = scmp.eq.s32.totalorder %s10, 1
    %p49 = scmp.ne.s32.totalorder %s44, %s46
    %p50 = scmp.eq.s32.totalorder %s10, 0
    %p51 = por %p49, %p50
    %p52 = scmp.ne.s32.totalorder %s44, %s46
    %p53 = scmp.eq.s32.totalorder %s15, 1
    %p54 = por %p52, %p53
    %p55 = scmp.ne.s32.totalorder %s46, %s47
    %p56 = scmp.eq.s32.totalorder %s15, 0
    %p57 = por %p55, %p56
    %p58 = scmp.ne.s32.totalorder %s46, %s47
    %p59 = scmp.eq.s32.totalorder %s16, 1
    %p60 = por %p58, %p59
    %p62 = scmp.ne.s32.totalorder %s47, %s61
    %p63 = scmp.eq.s32.totalorder %s16, 0
    %p64 = por %p62, %p63
    %s65 = ssub.s32 %s10, %s17
    %p66 = scmp.eq.s32.totalorder %s65, 0
    %s68 = sadd.s32 %s67, 1
    %s69 = scalar_select %p66, %s67, %s68
    %p72 = pneg %p66
    %p73 = scmp.eq.s32.totalorder %s10, 1
    %p74 = por %p72, %p73
    %p75 = scmp.ne.s32.totalorder %s67, %s70
    %p76 = scmp.eq.s32.totalorder %s10, 0
    %p77 = por %p75, %p76
    %p78 = scmp.ne.s32.totalorder %s67, %s70
    %p79 = scmp.eq.s32.totalorder %s15, 1
    %p80 = por %p78, %p79
    %p81 = scmp.ne.s32.totalorder %s70, %s71
    %p82 = scmp.eq.s32.totalorder %s15, 0
    %p83 = por %p81, %p82
    %p84 = scmp.ne.s32.totalorder %s70, %s71
    %p85 = scmp.eq.s32.totalorder %s16, 1
    %p86 = por %p84, %p85
    %p88 = scmp.ne.s32.totalorder %s71, %s87
    %p89 = scmp.eq.s32.totalorder %s16, 0
    %p90 = por %p88, %p89
    %s91 = ssub.s32 %s10, %s17
    %p92 = scmp.eq.s32.totalorder %s91, 0
    %s94 = sadd.s32 %s93, 1
    %s95 = scalar_select %p92, %s93, %s94
    %p98 = pneg %p92
    %p99 = scmp.eq.s32.totalorder %s10, 1
    %p100 = por %p98, %p99
    %p101 = scmp.ne.s32.totalorder %s93, %s96
    %p102 = scmp.eq.s32.totalorder %s10, 0
    %p103 = por %p101, %p102
    %p104 = scmp.ne.s32.totalorder %s93, %s96
    %p105 = scmp.eq.s32.totalorder %s15, 1
    %p106 = por %p104, %p105
    %p107 = scmp.ne.s32.totalorder %s96, %s97
    %p108 = scmp.eq.s32.totalorder %s15, 0
    %p109 = por %p107, %p108
    %p110 = scmp.ne.s32.totalorder %s96, %s97
    %p111 = scmp.eq.s32.totalorder %s16, 1
    %p112 = por %p110, %p111
    %p114 = scmp.ne.s32.totalorder %s97, %s113
    %p115 = scmp.eq.s32.totalorder %s16, 0
    %p116 = por %p114, %p115
    %p117 = scmp.le.s32.totalorder 1, %s10
    %p118 = scmp.lt.s32.totalorder %s10, 3
    %p119 = pnand %p117, %p118
    %p120 = pneg %p119
    // Predicated region
    $region9: #{tpu_custom_call.1} parent=5 // pred_check
      _
    $region10: #{tpu_custom_call.1} parent=5 // pred_check_branch
      %122 = sbr.rel (%p119) target = $region12
    $region11: #{tpu_custom_call.1} parent=5 // pred_region
      %s123 = ssub.s32 %s10, 1
      // Predicated region
      $region13: #{tpu_custom_call.1} parent=11 // pred_check
        %p124 = pneg %p57
      $region14: #{tpu_custom_call.1} parent=11 // pred_check_branch
        %126 = sbr.rel (%p124) target = $region16
      $region15: #{tpu_custom_call.1} parent=11 // pred_region
        _
      $region16: #{tpu_custom_call.1} parent=11 // pred_fallthru
        _
    $region12: #{tpu_custom_call.1} parent=5 // pred_fallthru
      _
    %p127 = scmp.lt.s32.totalorder %s10, 2
    // Predicated region
    $region17: #{tpu_custom_call.1} parent=5 // pred_check
      %p128 = pneg %p127
    $region18: #{tpu_custom_call.1} parent=5 // pred_check_branch
      %130 = sbr.rel (%p128) target = $region20
    $region19: #{tpu_custom_call.1} parent=5 // pred_region
      // Predicated region
      $region21: #{tpu_custom_call.1} parent=19 // pred_check
        %p131 = pneg %p30
      $region22: #{tpu_custom_call.1} parent=19 // pred_check_branch
        %133 = sbr.rel (%p131) target = $region24
      $region23: #{tpu_custom_call.1} parent=19 // pred_region
        %s134 = smul.u32 32, %s10
        %p135 = scmp.lt.s32.totalorder %s134, 63
        %s136 = scalar_select %p135, %s134, 63
        %s137 = smul.addr %s136, 8
        %s138 = scalar_lea.vmem %s0, %s137
        %s139 = smul.u32 32, %s10
      $region24: #{tpu_custom_call.1} parent=19 // pred_fallthru
        _
    $region20: #{tpu_custom_call.1} parent=5 // pred_fallthru
      _
    %p140 = scmp.le.s32.totalorder 1, %s10
    %p141 = scmp.lt.s32.totalorder %s10, 3
    %p142 = pnand %p140, %p141
    %p143 = pneg %p142
    // Predicated region
    $region25: #{tpu_custom_call.1} parent=5 // pred_check
      _
    $region26: #{tpu_custom_call.1} parent=5 // pred_check_branch
      %145 = sbr.rel (%p142) target = $region28
    $region27: #{tpu_custom_call.1} parent=5 // pred_region
      %s146 = ssub.s32 %s10, 1
      %s147 = smul.u32 32, %s15
      %p148 = scmp.lt.s32.totalorder %s147, 63
      %s149 = scalar_select %p148, %s147, 63
      %s150 = smul.addr %s149, 8
      %s151 = scalar_lea.vmem %s0, %s150
      %p152 = pneg %p36
      %p153 = pneg %p33
      %p154 = pneg %p57
      %p155 = pneg %p54
      %p156 = pneg %p83
      %p157 = pneg %p80
      %s158 = smul.u32 32, %s15
      %p159 = scmp.lt.s32.totalorder %s158, 63
      %s160 = scalar_select %p159, %s158, 63
      %s161 = smul.addr %s160, 8
      %s162 = scalar_lea.vmem %s2, %s161
      %p163 = pneg %p109
      %p164 = pneg %p106
      %s165 = smul.u32 32, %s15
      %p166 = scmp.lt.s32.totalorder %s165, 63
      %s167 = scalar_select %p166, %s165, 63
      %s168 = smul.addr %s167, 8
      %s169 = scalar_lea.vmem %s3, %s168
      %s170 = smul.u32 32, %s15
      %p171 = scmp.lt.s32.totalorder %s170, 63
      %s172 = scalar_select %p171, %s170, 63
      %s173 = smul.addr %s172, 8
      %s174 = scalar_lea.vmem %s0, %s173
      %s175 = smul.u32 32, %s15
      %s176 = smul.u32 32, %s15
      %p177 = scmp.lt.s32.totalorder %s176, 63
      %s178 = scalar_select %p177, %s176, 63
      %s179 = smul.addr %s178, 8
      %s180 = scalar_lea.vmem %s2, %s179
      %s181 = smul.u32 32, %s15
      %s182 = smul.u32 32, %s15
      %p183 = scmp.lt.s32.totalorder %s182, 63
      %s184 = scalar_select %p183, %s182, 63
      %s185 = smul.addr %s184, 8
      %s186 = scalar_lea.vmem %s3, %s185
      %s187 = smul.u32 32, %s15
      %v188 = vld [vmem:[%s174] sm:$0xff]
      %v189 = vld [vmem:[%s174 + $0x8] sm:$0xff]
      %v190 = vld [vmem:[%s174 + $0x10] sm:$0xff]
      %v191 = vld [vmem:[%s174 + $0x18] sm:$0xff]
      %v192 = vld [vmem:[%s174 + $0x20] sm:$0xff]
      %v193 = vld [vmem:[%s174 + $0x28] sm:$0xff]
      %v194 = vld [vmem:[%s174 + $0x30] sm:$0xff]
      %v195 = vld [vmem:[%s174 + $0x38] sm:$0xff]
      %v196 = vld [vmem:[%s174 + $0x40] sm:$0xff]
      %v197 = vld [vmem:[%s174 + $0x48] sm:$0xff]
      %v198 = vld [vmem:[%s174 + $0x50] sm:$0xff]
      %v199 = vld [vmem:[%s174 + $0x58] sm:$0xff]
      %v200 = vld [vmem:[%s174 + $0x60] sm:$0xff]
      %v201 = vld [vmem:[%s174 + $0x68] sm:$0xff]
      %v202 = vld [vmem:[%s174 + $0x70] sm:$0xff]
      %v203 = vld [vmem:[%s174 + $0x78] sm:$0xff]
      %v204 = vld [vmem:[%s174 + $0x80] sm:$0xff]
      %v205 = vld [vmem:[%s174 + $0x88] sm:$0xff]
      %v206 = vld [vmem:[%s174 + $0x90] sm:$0xff]
      %v207 = vld [vmem:[%s174 + $0x98] sm:$0xff]
      %v208 = vld [vmem:[%s174 + $0xa0] sm:$0xff]
      %v209 = vld [vmem:[%s174 + $0xa8] sm:$0xff]
      %v210 = vld [vmem:[%s174 + $0xb0] sm:$0xff]
      %v211 = vld [vmem:[%s174 + $0xb8] sm:$0xff]
      %v212 = vld [vmem:[%s174 + $0xc0] sm:$0xff]
      %v213 = vld [vmem:[%s174 + $0xc8] sm:$0xff]
      %v214 = vld [vmem:[%s174 + $0xd0] sm:$0xff]
      %v215 = vld [vmem:[%s174 + $0xd8] sm:$0xff]
      %v216 = vld [vmem:[%s174 + $0xe0] sm:$0xff]
      %v217 = vld [vmem:[%s174 + $0xe8] sm:$0xff]
      %v218 = vld [vmem:[%s174 + $0xf0] sm:$0xff]
      %v219 = vld [vmem:[%s174 + $0xf8] sm:$0xff]
      %v220 = vld [vmem:[%s1] sm:$0xff]
      %v221 = vld [vmem:[%s1 + $0x8] sm:$0xff]
      %vm222 = vcmask 130048
      %v224 = vsel %vm222, %v188, 0
      %v227 = vsel %vm222, %v189, 0
      %v230 = vsel %vm222, %v190, 0
      %v233 = vsel %vm222, %v191, 0
      %v236 = vsel %vm222, %v192, 0
      %v239 = vsel %vm222, %v193, 0
      %v242 = vsel %vm222, %v194, 0
      %v245 = vsel %vm222, %v195, 0
      %v248 = vsel %vm222, %v196, 0
      %v251 = vsel %vm222, %v197, 0
      %v254 = vsel %vm222, %v198, 0
      %v257 = vsel %vm222, %v199, 0
      %v260 = vsel %vm222, %v200, 0
      %v263 = vsel %vm222, %v201, 0
      %v266 = vsel %vm222, %v202, 0
      %v269 = vsel %vm222, %v203, 0
      %v272 = vsel %vm222, %v204, 0
      %v275 = vsel %vm222, %v205, 0
      %v278 = vsel %vm222, %v206, 0
      %v281 = vsel %vm222, %v207, 0
      %v284 = vsel %vm222, %v208, 0
      %v287 = vsel %vm222, %v209, 0
      %v290 = vsel %vm222, %v210, 0
      %v293 = vsel %vm222, %v211, 0
      %v296 = vsel %vm222, %v212, 0
      %v299 = vsel %vm222, %v213, 0
      %v302 = vsel %vm222, %v214, 0
      %v305 = vsel %vm222, %v215, 0
      %v308 = vsel %vm222, %v216, 0
      %v311 = vsel %vm222, %v217, 0
      %v314 = vsel %vm222, %v218, 0
      %v317 = vsel %vm222, %v219, 0
      %319 = vmatpush.msra.mxu0 0.0
      %320 = vmatpush.msra.mxu0 0.0
      %321 = vmatpush.msra.mxu0 0.0
      %322 = vmatpush.msra.mxu0 0.0
      %323 = vmatpush.msra.mxu0 0.0
      %324 = vmatpush.msra.mxu0 0.0
      %325 = vmatpush.msra.mxu0 0.0
      %326 = vmatpush.msra.mxu0 0.0
      %327 = vmatpush.msra.mxu0 0.0
      %328 = vmatpush.msra.mxu0 0.0
      %329 = vmatpush.msra.mxu0 0.0
      %330 = vmatpush.msra.mxu0 0.0
      %331 = vmatpush.msra.mxu0 0.0
      %332 = vmatpush.msra.mxu0 0.0
      %333 = vmatpush.msra.mxu0 %v221
      %334 = vmatpush.msra.mxu0 %v220
      %335 = vmatmul.f32.gmra.mxu0 %v224
      %v336 = vpop.f32.mrf.mxu0
      %v337 = vadd.f32 0.0, %v336
      %338 = vmatmul.f32.gmra.mxu0 %v227
      %v339 = vpop.f32.mrf.mxu0
      %v340 = vadd.f32 0.0, %v339
      %341 = vmatmul.f32.gmra.mxu0 %v230
      %v342 = vpop.f32.mrf.mxu0
      %v343 = vadd.f32 0.0, %v342
      %344 = vmatmul.f32.gmra.mxu0 %v233
      %v345 = vpop.f32.mrf.mxu0
      %v346 = vadd.f32 0.0, %v345
      %347 = vmatmul.f32.gmra.mxu0 %v236
      %v348 = vpop.f32.mrf.mxu0
      %v349 = vadd.f32 0.0, %v348
      %350 = vmatmul.f32.gmra.mxu0 %v239
      %v351 = vpop.f32.mrf.mxu0
      %v352 = vadd.f32 0.0, %v351
      %353 = vmatmul.f32.gmra.mxu0 %v242
      %v354 = vpop.f32.mrf.mxu0
      %v355 = vadd.f32 0.0, %v354
      %356 = vmatmul.f32.gmra.mxu0 %v245
      %v357 = vpop.f32.mrf.mxu0
      %v358 = vadd.f32 0.0, %v357
      %359 = vmatmul.f32.gmra.mxu0 %v248
      %v360 = vpop.f32.mrf.mxu0
      %v361 = vadd.f32 0.0, %v360
      %362 = vmatmul.f32.gmra.mxu0 %v251
      %v363 = vpop.f32.mrf.mxu0
      %v364 = vadd.f32 0.0, %v363
      %365 = vmatmul.f32.gmra.mxu0 %v254
      %v366 = vpop.f32.mrf.mxu0
      %v367 = vadd.f32 0.0, %v366
      %368 = vmatmul.f32.gmra.mxu0 %v257
      %v369 = vpop.f32.mrf.mxu0
      %v370 = vadd.f32 0.0, %v369
      %371 = vmatmul.f32.gmra.mxu0 %v260
      %v372 = vpop.f32.mrf.mxu0
      %v373 = vadd.f32 0.0, %v372
      %374 = vmatmul.f32.gmra.mxu0 %v263
      %v375 = vpop.f32.mrf.mxu0
      %v376 = vadd.f32 0.0, %v375
      %377 = vmatmul.f32.gmra.mxu0 %v266
      %v378 = vpop.f32.mrf.mxu0
      %v379 = vadd.f32 0.0, %v378
      %380 = vmatmul.f32.gmra.mxu0 %v269
      %v381 = vpop.f32.mrf.mxu0
      %v382 = vadd.f32 0.0, %v381
      %383 = vmatmul.f32.gmra.mxu0 %v272
      %v384 = vpop.f32.mrf.mxu0
      %v385 = vadd.f32 0.0, %v384
      %386 = vmatmul.f32.gmra.mxu0 %v275
      %v387 = vpop.f32.mrf.mxu0
      %v388 = vadd.f32 0.0, %v387
      %389 = vmatmul.f32.gmra.mxu0 %v278
      %v390 = vpop.f32.mrf.mxu0
      %v391 = vadd.f32 0.0, %v390
      %392 = vmatmul.f32.gmra.mxu0 %v281
      %v393 = vpop.f32.mrf.mxu0
      %v394 = vadd.f32 0.0, %v393
      %395 = vmatmul.f32.gmra.mxu0 %v284
      %v396 = vpop.f32.mrf.mxu0
      %v397 = vadd.f32 0.0, %v396
      %398 = vmatmul.f32.gmra.mxu0 %v287
      %v399 = vpop.f32.mrf.mxu0
      %v400 = vadd.f32 0.0, %v399
      %401 = vmatmul.f32.gmra.mxu0 %v290
      %v402 = vpop.f32.mrf.mxu0
      %v403 = vadd.f32 0.0, %v402
      %404 = vmatmul.f32.gmra.mxu0 %v293
      %v405 = vpop.f32.mrf.mxu0
      %v406 = vadd.f32 0.0, %v405
      %407 = vmatmul.f32.gmra.mxu0 %v296
      %v408 = vpop.f32.mrf.mxu0
      %v409 = vadd.f32 0.0, %v408
      %410 = vmatmul.f32.gmra.mxu0 %v299
      %v411 = vpop.f32.mrf.mxu0
      %v412 = vadd.f32 0.0, %v411
      %413 = vmatmul.f32.gmra.mxu0 %v302
      %v414 = vpop.f32.mrf.mxu0
      %v415 = vadd.f32 0.0, %v414
      %416 = vmatmul.f32.gmra.mxu0 %v305
      %v417 = vpop.f32.mrf.mxu0
      %v418 = vadd.f32 0.0, %v417
      %419 = vmatmul.f32.gmra.mxu0 %v308
      %v420 = vpop.f32.mrf.mxu0
      %v421 = vadd.f32 0.0, %v420
      %422 = vmatmul.f32.gmra.mxu0 %v311
      %v423 = vpop.f32.mrf.mxu0
      %v424 = vadd.f32 0.0, %v423
      %425 = vmatmul.f32.gmra.mxu0 %v314
      %v426 = vpop.f32.mrf.mxu0
      %v427 = vadd.f32 0.0, %v426
      %428 = vmatmul.f32.gmra.mxu0 %v317
      %v429 = vpop.f32.mrf.mxu0
      %v430 = vadd.f32 0.0, %v429
      %431 = vdwg.mxu0
      %vm432 = vcmask 261120
      %433 = vst.msk [vmem:[%s180] sm:$0xff] %vm432, %v337
      %434 = vst.msk [vmem:[%s180 + $0x8] sm:$0xff] %vm432, %v340
      %435 = vst.msk [vmem:[%s180 + $0x10] sm:$0xff] %vm432, %v343
      %436 = vst.msk [vmem:[%s180 + $0x18] sm:$0xff] %vm432, %v346
      %437 = vst.msk [vmem:[%s180 + $0x20] sm:$0xff] %vm432, %v349
      %438 = vst.msk [vmem:[%s180 + $0x28] sm:$0xff] %vm432, %v352
      %439 = vst.msk [vmem:[%s180 + $0x30] sm:$0xff] %vm432, %v355
      %440 = vst.msk [vmem:[%s180 + $0x38] sm:$0xff] %vm432, %v358
      %441 = vst.msk [vmem:[%s180 + $0x40] sm:$0xff] %vm432, %v361
      %442 = vst.msk [vmem:[%s180 + $0x48] sm:$0xff] %vm432, %v364
      %443 = vst.msk [vmem:[%s180 + $0x50] sm:$0xff] %vm432, %v367
      %444 = vst.msk [vmem:[%s180 + $0x58] sm:$0xff] %vm432, %v370
      %445 = vst.msk [vmem:[%s180 + $0x60] sm:$0xff] %vm432, %v373
      %446 = vst.msk [vmem:[%s180 + $0x68] sm:$0xff] %vm432, %v376
      %447 = vst.msk [vmem:[%s180 + $0x70] sm:$0xff] %vm432, %v379
      %448 = vst.msk [vmem:[%s180 + $0x78] sm:$0xff] %vm432, %v382
      %449 = vst.msk [vmem:[%s180 + $0x80] sm:$0xff] %vm432, %v385
      %450 = vst.msk [vmem:[%s180 + $0x88] sm:$0xff] %vm432, %v388
      %451 = vst.msk [vmem:[%s180 + $0x90] sm:$0xff] %vm432, %v391
      %452 = vst.msk [vmem:[%s180 + $0x98] sm:$0xff] %vm432, %v394
      %453 = vst.msk [vmem:[%s180 + $0xa0] sm:$0xff] %vm432, %v397
      %454 = vst.msk [vmem:[%s180 + $0xa8] sm:$0xff] %vm432, %v400
      %455 = vst.msk [vmem:[%s180 + $0xb0] sm:$0xff] %vm432, %v403
      %456 = vst.msk [vmem:[%s180 + $0xb8] sm:$0xff] %vm432, %v406
      %457 = vst.msk [vmem:[%s180 + $0xc0] sm:$0xff] %vm432, %v409
      %458 = vst.msk [vmem:[%s180 + $0xc8] sm:$0xff] %vm432, %v412
      %459 = vst.msk [vmem:[%s180 + $0xd0] sm:$0xff] %vm432, %v415
      %460 = vst.msk [vmem:[%s180 + $0xd8] sm:$0xff] %vm432, %v418
      %461 = vst.msk [vmem:[%s180 + $0xe0] sm:$0xff] %vm432, %v421
      %462 = vst.msk [vmem:[%s180 + $0xe8] sm:$0xff] %vm432, %v424
      %463 = vst.msk [vmem:[%s180 + $0xf0] sm:$0xff] %vm432, %v427
      %464 = vst.msk [vmem:[%s180 + $0xf8] sm:$0xff] %vm432, %v430
      %497 = vrot.lane.b32.xlu0 %v337, 96
      %v498 = vpop.permute.xlu0 %497
      %499 = vrot.lane.b32.xlu0 %v340, 96
      %v500 = vpop.permute.xlu0 %499
      %501 = vrot.lane.b32.xlu0 %v343, 96
      %v502 = vpop.permute.xlu0 %501
      %503 = vrot.lane.b32.xlu0 %v346, 96
      %v504 = vpop.permute.xlu0 %503
      %505 = vrot.lane.b32.xlu0 %v349, 96
      %v506 = vpop.permute.xlu0 %505
      %507 = vrot.lane.b32.xlu0 %v352, 96
      %v508 = vpop.permute.xlu0 %507
      %509 = vrot.lane.b32.xlu0 %v355, 96
      %v510 = vpop.permute.xlu0 %509
      %511 = vrot.lane.b32.xlu0 %v358, 96
      %v512 = vpop.permute.xlu0 %511
      %513 = vrot.lane.b32.xlu0 %v361, 96
      %v514 = vpop.permute.xlu0 %513
      %515 = vrot.lane.b32.xlu0 %v364, 96
      %v516 = vpop.permute.xlu0 %515
      %517 = vrot.lane.b32.xlu0 %v367, 96
      %v518 = vpop.permute.xlu0 %517
      %519 = vrot.lane.b32.xlu0 %v370, 96
      %v520 = vpop.permute.xlu0 %519
      %521 = vrot.lane.b32.xlu0 %v373, 96
      %v522 = vpop.permute.xlu0 %521
      %523 = vrot.lane.b32.xlu0 %v376, 96
      %v524 = vpop.permute.xlu0 %523
      %525 = vrot.lane.b32.xlu0 %v379, 96
      %v526 = vpop.permute.xlu0 %525
      %527 = vrot.lane.b32.xlu0 %v382, 96
      %v528 = vpop.permute.xlu0 %527
      %529 = vrot.lane.b32.xlu0 %v385, 96
      %v530 = vpop.permute.xlu0 %529
      %531 = vrot.lane.b32.xlu0 %v388, 96
      %v532 = vpop.permute.xlu0 %531
      %533 = vrot.lane.b32.xlu0 %v391, 96
      %v534 = vpop.permute.xlu0 %533
      %535 = vrot.lane.b32.xlu0 %v394, 96
      %v536 = vpop.permute.xlu0 %535
      %537 = vrot.lane.b32.xlu0 %v397, 96
      %v538 = vpop.permute.xlu0 %537
      %539 = vrot.lane.b32.xlu0 %v400, 96
      %v540 = vpop.permute.xlu0 %539
      %541 = vrot.lane.b32.xlu0 %v403, 96
      %v542 = vpop.permute.xlu0 %541
      %543 = vrot.lane.b32.xlu0 %v406, 96
      %v544 = vpop.permute.xlu0 %543
      %545 = vrot.lane.b32.xlu0 %v409, 96
      %v546 = vpop.permute.xlu0 %545
      %547 = vrot.lane.b32.xlu0 %v412, 96
      %v548 = vpop.permute.xlu0 %547
      %549 = vrot.lane.b32.xlu0 %v415, 96
      %v550 = vpop.permute.xlu0 %549
      %551 = vrot.lane.b32.xlu0 %v418, 96
      %v552 = vpop.permute.xlu0 %551
      %553 = vrot.lane.b32.xlu0 %v421, 96
      %v554 = vpop.permute.xlu0 %553
      %555 = vrot.lane.b32.xlu0 %v424, 96
      %v556 = vpop.permute.xlu0 %555
      %557 = vrot.lane.b32.xlu0 %v427, 96
      %v558 = vpop.permute.xlu0 %557
      %559 = vrot.lane.b32.xlu0 %v430, 96
      %v560 = vpop.permute.xlu0 %559
      %593 = vst.msk [vmem:[%s186] sm:$0xff] %vm432, %v498
      %594 = vst.msk [vmem:[%s186 + $0x8] sm:$0xff] %vm432, %v500
      %595 = vst.msk [vmem:[%s186 + $0x10] sm:$0xff] %vm432, %v502
      %596 = vst.msk [vmem:[%s186 + $0x18] sm:$0xff] %vm432, %v504
      %597 = vst.msk [vmem:[%s186 + $0x20] sm:$0xff] %vm432, %v506
      %598 = vst.msk [vmem:[%s186 + $0x28] sm:$0xff] %vm432, %v508
      %599 = vst.msk [vmem:[%s186 + $0x30] sm:$0xff] %vm432, %v510
      %600 = vst.msk [vmem:[%s186 + $0x38] sm:$0xff] %vm432, %v512
      %601 = vst.msk [vmem:[%s186 + $0x40] sm:$0xff] %vm432, %v514
      %602 = vst.msk [vmem:[%s186 + $0x48] sm:$0xff] %vm432, %v516
      %603 = vst.msk [vmem:[%s186 + $0x50] sm:$0xff] %vm432, %v518
      %604 = vst.msk [vmem:[%s186 + $0x58] sm:$0xff] %vm432, %v520
      %605 = vst.msk [vmem:[%s186 + $0x60] sm:$0xff] %vm432, %v522
      %606 = vst.msk [vmem:[%s186 + $0x68] sm:$0xff] %vm432, %v524
      %607 = vst.msk [vmem:[%s186 + $0x70] sm:$0xff] %vm432, %v526
      %608 = vst.msk [vmem:[%s186 + $0x78] sm:$0xff] %vm432, %v528
      %609 = vst.msk [vmem:[%s186 + $0x80] sm:$0xff] %vm432, %v530
      %610 = vst.msk [vmem:[%s186 + $0x88] sm:$0xff] %vm432, %v532
      %611 = vst.msk [vmem:[%s186 + $0x90] sm:$0xff] %vm432, %v534
      %612 = vst.msk [vmem:[%s186 + $0x98] sm:$0xff] %vm432, %v536
      %613 = vst.msk [vmem:[%s186 + $0xa0] sm:$0xff] %vm432, %v538
      %614 = vst.msk [vmem:[%s186 + $0xa8] sm:$0xff] %vm432, %v540
      %615 = vst.msk [vmem:[%s186 + $0xb0] sm:$0xff] %vm432, %v542
      %616 = vst.msk [vmem:[%s186 + $0xb8] sm:$0xff] %vm432, %v544
      %617 = vst.msk [vmem:[%s186 + $0xc0] sm:$0xff] %vm432, %v546
      %618 = vst.msk [vmem:[%s186 + $0xc8] sm:$0xff] %vm432, %v548
      %619 = vst.msk [vmem:[%s186 + $0xd0] sm:$0xff] %vm432, %v550
      %620 = vst.msk [vmem:[%s186 + $0xd8] sm:$0xff] %vm432, %v552
      %621 = vst.msk [vmem:[%s186 + $0xe0] sm:$0xff] %vm432, %v554
      %622 = vst.msk [vmem:[%s186 + $0xe8] sm:$0xff] %vm432, %v556
      %623 = vst.msk [vmem:[%s186 + $0xf0] sm:$0xff] %vm432, %v558
      %624 = vst.msk [vmem:[%s186 + $0xf8] sm:$0xff] %vm432, %v560
      %s625 = smul.u32 32, %s15
      %p626 = scmp.lt.s32.totalorder %s625, 63
      %s627 = scalar_select %p626, %s625, 63
      %s628 = smul.addr %s627, 8
      %s629 = scalar_lea.vmem %s2, %s628
      %s630 = smul.u32 32, %s15
      %p631 = scmp.lt.s32.totalorder %s630, 63
      %s632 = scalar_select %p631, %s630, 63
      %s633 = smul.addr %s632, 8
      %s634 = scalar_lea.vmem %s3, %s633
      // Predicated region
      $region29: #{tpu_custom_call.1} parent=27 // pred_check
        %p635 = pneg %p80
      $region30: #{tpu_custom_call.1} parent=27 // pred_check_branch
        %637 = sbr.rel (%p635) target = $region32
      $region31: #{tpu_custom_call.1} parent=27 // pred_region
        %s638 = smul.u32 32, %s15
      $region32: #{tpu_custom_call.1} parent=27 // pred_fallthru
        _
      // Predicated region
      $region33: #{tpu_custom_call.1} parent=27 // pred_check
        %p639 = pneg %p106
      $region34: #{tpu_custom_call.1} parent=27 // pred_check_branch
        %641 = sbr.rel (%p639) target = $region36
      $region35: #{tpu_custom_call.1} parent=27 // pred_region
        %s642 = smul.u32 32, %s15
      $region36: #{tpu_custom_call.1} parent=27 // pred_fallthru
        _
    $region28: #{tpu_custom_call.1} parent=5 // pred_fallthru
      _
    %p643 = scmp.le.s32.totalorder 2, %s10
    // Predicated region
    $region37: #{tpu_custom_call.1} parent=5 // pred_check
      %p644 = pneg %p643
    $region38: #{tpu_custom_call.1} parent=5 // pred_check_branch
      %646 = sbr.rel (%p644) target = $region40
    $region39: #{tpu_custom_call.1} parent=5 // pred_region
      %s647 = ssub.s32 %s10, 2
      // Predicated region
      $region41: #{tpu_custom_call.1} parent=39 // pred_check
        %p648 = pneg %p86
      $region42: #{tpu_custom_call.1} parent=39 // pred_check_branch
        %650 = sbr.rel (%p648) target = $region44
      $region43: #{tpu_custom_call.1} parent=39 // pred_region
        %s651 = smul.u32 32, %s16
        %p652 = scmp.lt.s32.totalorder %s651, 63
        %s653 = scalar_select %p652, %s651, 63
        %s654 = smul.addr %s653, 8
        %s655 = scalar_lea.vmem %s2, %s654
      $region44: #{tpu_custom_call.1} parent=39 // pred_fallthru
        _
      // Predicated region
      $region45: #{tpu_custom_call.1} parent=39 // pred_check
        %p656 = pneg %p112
      $region46: #{tpu_custom_call.1} parent=39 // pred_check_branch
        %658 = sbr.rel (%p656) target = $region48
      $region47: #{tpu_custom_call.1} parent=39 // pred_region
        %s659 = smul.u32 32, %s16
        %p660 = scmp.lt.s32.totalorder %s659, 63
        %s661 = scalar_select %p660, %s659, 63
        %s662 = smul.addr %s661, 8
        %s663 = scalar_lea.vmem %s3, %s662
      $region48: #{tpu_custom_call.1} parent=39 // pred_fallthru
        _
    $region40: #{tpu_custom_call.1} parent=5 // pred_fallthru
      _
  $region6: #{tpu_custom_call.1} parent=0 // loop_footer
    %s14 = sadd.s32 1, %s10
  $region7: #{tpu_custom_call.1} parent=0 // loop_footer_branch
    %9 = sbr.rel target = $region3
  $region8: #{tpu_custom_call.1} parent=0 // loop_exit
    _

</llo_original>
